<compile_context>
chip_gen: v5e
topology: v5e:2x2
jax: 0.10.0
libtpu: 0.0.40
codegen_flags: <defaults>
</compile_context>

<pallas_src>
import jax
import jax.numpy as jnp
from jax.experimental import pallas as pl
from jax.experimental.pallas import tpu as pltpu


def _round_up(x, m):
    return ((x + m - 1) // m) * m


def _gate_kernel(x_ref, w1_ref, b1_ref, w2_ref, b2_ref, feat_ref, gate_ref):
    """One batch-row tile: a = sigmoid(relu(x@W1+b1)@W2+b2); feature = a * x."""
    x = x_ref[...]                                                    # (tm, Dp) f32
    h = jnp.dot(x, w1_ref[...], preferred_element_type=jnp.float32) + b1_ref[...]
    h = jnp.maximum(h, 0.0)                                           # ReLU (VPU)
    z = jnp.dot(h, w2_ref[...], preferred_element_type=jnp.float32) + b2_ref[...]
    a = jax.nn.sigmoid(z)                                             # (tm, Dp) (EUP)
    gate_ref[...] = a.astype(gate_ref.dtype)
    feat_ref[...] = (a * x).astype(feat_ref.dtype)


def gate_module_forward(x, w1, b1, w2, b2, *, gate_type, field_size,
                        embedding_size, block_rows=256):
    """Pallas implementation of Gate_Module.forward.

    x  : (B, F, E) or (B, F*E) float
    w1 : (raw_dim, hidden)   -- transposed vs. torch Linear.weight (out, in)
    b1 : (hidden,)
    w2 : (hidden, out_dim)   -- out_dim = raw_dim ('normal_bit') or F ('normal_vector')
    b2 : (out_dim,)
    Returns (feature, a_weight) with the same semantics as the PyTorch module.
    """
    assert gate_type in ("normal_bit", "normal_vector")
    raw_dim = field_size * embedding_size
    orig_ndim = x.ndim
    B = x.shape[0]
    xc = x.reshape(B, raw_dim).astype(jnp.float32)

    hidden = w1.shape[1]

    # Fold the per-field -> per-element gate replication into W2/b2 (wrapper-side,
    # constant-folded by XLA).  sigmoid(z)@repeat == sigmoid(z@repeat) because the
    # expansion is a pure column duplication and sigmoid is elementwise.
    if gate_type == "normal_vector":
        w2_eff = jnp.repeat(w2.astype(jnp.float32), embedding_size, axis=1)
        b2_eff = jnp.repeat(b2.astype(jnp.float32), embedding_size, axis=0)
    else:
        w2_eff = w2.astype(jnp.float32)
        b2_eff = b2.astype(jnp.float32)

    # Pad the feature/gate lane width to a multiple of 128 -> unmasked vector stores.
    Dp = max(128, _round_up(raw_dim, 128))
    pad_d = Dp - raw_dim
    xc_p = jnp.pad(xc, ((0, 0), (0, pad_d))) if pad_d else xc
    w1_p = jnp.pad(w1.astype(jnp.float32), ((0, pad_d), (0, 0))) if pad_d \
        else w1.astype(jnp.float32)
    w2_p = jnp.pad(w2_eff, ((0, 0), (0, pad_d))) if pad_d else w2_eff
    b2_p = jnp.pad(b2_eff, (0, pad_d)) if pad_d else b2_eff

    # Pad the batch to a multiple of the row tile so every grid block is full.
    tm = min(block_rows, _round_up(B, 8))
    Bp = _round_up(B, tm)
    if Bp != B:
        xc_p = jnp.pad(xc_p, ((0, Bp - B), (0, 0)))

    b1_2d = b1.reshape(1, hidden).astype(jnp.float32)
    b2_2d = b2_p.reshape(1, Dp)

    flops = 2 * Bp * Dp * hidden + 2 * Bp * hidden * Dp + 4 * Bp * Dp
    bytes_accessed = 4 * (3 * Bp * Dp + Dp * hidden + hidden * Dp + hidden + Dp)

    feat_p, aw_p = pl.pallas_call(
        _gate_kernel,
        out_shape=(jax.ShapeDtypeStruct((Bp, Dp), jnp.float32),
                   jax.ShapeDtypeStruct((Bp, Dp), jnp.float32)),
        grid_spec=pltpu.PrefetchScalarGridSpec(
            num_scalar_prefetch=0,
            grid=(Bp // tm,),
            in_specs=[
                pl.BlockSpec((tm, Dp), lambda i: (i, 0)),        # x rows
                pl.BlockSpec((Dp, hidden), lambda i: (0, 0)),    # W1 (resident)
                pl.BlockSpec((1, hidden), lambda i: (0, 0)),     # b1
                pl.BlockSpec((hidden, Dp), lambda i: (0, 0)),    # W2_eff (resident)
                pl.BlockSpec((1, Dp), lambda i: (0, 0)),         # b2_eff
            ],
            out_specs=[
                pl.BlockSpec((tm, Dp), lambda i: (i, 0)),        # gated feature
                pl.BlockSpec((tm, Dp), lambda i: (i, 0)),        # gate activations
            ],
        ),
        compiler_params=pltpu.CompilerParams(
            dimension_semantics=("parallel",)),
        cost_estimate=pl.CostEstimate(
            flops=flops, transcendentals=Bp * Dp,
            bytes_accessed=bytes_accessed),
    )(xc_p, w1_p, b1_2d, w2_p, b2_2d)

    feature = feat_p[:B, :raw_dim]
    gates = aw_p[:B, :raw_dim]

    if gate_type == "normal_bit":
        a_weight = gates                                            # (B, raw_dim)
        if orig_ndim == 3:
            feature = feature.reshape(B, -1, embedding_size)
        return feature, a_weight
    else:  # normal_vector
        # Every column of a field group holds the same gate value; take column 0.
        a_weight = gates.reshape(B, field_size, embedding_size)[:, :, 0]
        if orig_ndim == 3:
            feature = feature.reshape(B, field_size, embedding_size)
        else:
            # Faithful to the reference module: for 2-D inputs the PyTorch code
            # returns torch.reshape(x, ...) (the raw input), not the gated feature.
            feature = x.reshape(B, -1)
        return feature, a_weight


def _reference_forward(x, w1, b1, w2, b2, gate_type, field_size, embedding_size):
    """Plain-JAX reference with the same semantics as Gate_Module.forward."""
    B = x.shape[0]
    raw_dim = field_size * embedding_size
    emb_concat = x.reshape(B, raw_dim).astype(jnp.float32)
    h = jnp.maximum(
        jnp.dot(emb_concat, w1, preferred_element_type=jnp.float32) + b1, 0.0)
    a = jax.nn.sigmoid(
        jnp.dot(h, w2, preferred_element_type=jnp.float32) + b2)
    if gate_type == "normal_bit":
        feat = a * emb_concat
        if x.ndim == 3:
            feat = feat.reshape(B, -1, embedding_size)
        return feat, a
    else:
        emb = x.reshape(B, field_size, embedding_size) if x.ndim == 2 else x
        feat = a[:, :, None] * emb
        if x.ndim == 2:
            feat = x.reshape(B, -1)
        return feat, a


if __name__ == "__main__":
    # Small, module-consistent shapes: F*E = 128 keeps the feature output lane-dense.
    embedding_size = 32
    field_size = 4
    batch = 8
    raw_dim = embedding_size * field_size  # 128

    key = jax.random.PRNGKey(0)
    kx, k1, k2, k3, k4, k5, k6 = jax.random.split(key, 7)

    x = jax.random.normal(kx, (batch, field_size, embedding_size), dtype=jnp.float32)

    # Deterministic init mimicking torch.nn.Linear default: U(-1/sqrt(fan_in), +).
    bound = 1.0 / (raw_dim ** 0.5)
    w1 = jax.random.uniform(k1, (raw_dim, raw_dim), jnp.float32, -bound, bound)
    b1 = jax.random.uniform(k2, (raw_dim,), jnp.float32, -bound, bound)
    w2_bit = jax.random.uniform(k3, (raw_dim, raw_dim), jnp.float32, -bound, bound)
    b2_bit = jax.random.uniform(k4, (raw_dim,), jnp.float32, -bound, bound)
    w2_vec = jax.random.uniform(k5, (raw_dim, field_size), jnp.float32, -bound, bound)
    b2_vec = jax.random.uniform(k6, (field_size,), jnp.float32, -bound, bound)

    # --- gate_type == 'normal_bit' ---
    feat_bit, aw_bit = gate_module_forward(
        x, w1, b1, w2_bit, b2_bit, gate_type="normal_bit",
        field_size=field_size, embedding_size=embedding_size)
    feat_bit, aw_bit = jax.block_until_ready((feat_bit, aw_bit))
    ref_feat_bit, ref_aw_bit = _reference_forward(
        x, w1, b1, w2_bit, b2_bit, "normal_bit", field_size, embedding_size)
    assert feat_bit.shape == (batch, field_size, embedding_size)
    assert aw_bit.shape == (batch, raw_dim)
    assert jnp.allclose(feat_bit, ref_feat_bit, atol=2e-3, rtol=2e-3)
    assert jnp.allclose(aw_bit, ref_aw_bit, atol=2e-3, rtol=2e-3)

    # --- gate_type == 'normal_vector' ---
    feat_vec, aw_vec = gate_module_forward(
        x, w1, b1, w2_vec, b2_vec, gate_type="normal_vector",
        field_size=field_size, embedding_size=embedding_size)
    feat_vec, aw_vec = jax.block_until_ready((feat_vec, aw_vec))
    ref_feat_vec, ref_aw_vec = _reference_forward(
        x, w1, b1, w2_vec, b2_vec, "normal_vector", field_size, embedding_size)
    assert feat_vec.shape == (batch, field_size, embedding_size)
    assert aw_vec.shape == (batch, field_size)
    assert jnp.allclose(feat_vec, ref_feat_vec, atol=2e-3, rtol=2e-3)
    assert jnp.allclose(aw_vec, ref_aw_vec, atol=2e-3, rtol=2e-3)

    # TODO(synk): self.batchnorm (LayerNorm) and self.sofmax are defined in the module
    # but never used in forward(), so they are intentionally not implemented.
    print("KERNEL_OK")
</pallas_src>

<mosaic_0001>
module attributes {stable_mosaic.version = 11 : i64} {
  func.func @_gate_kernel(%arg0: i32, %arg1: memref<8x128xf32, #tpu.memory_space<vmem>>, %arg2: memref<128x128xf32, #tpu.memory_space<vmem>>, %arg3: memref<1x128xf32, #tpu.memory_space<vmem>>, %arg4: memref<128x128xf32, #tpu.memory_space<vmem>>, %arg5: memref<1x128xf32, #tpu.memory_space<vmem>>, %arg6: memref<8x128xf32, #tpu.memory_space<vmem>>, %arg7: memref<8x128xf32, #tpu.memory_space<vmem>>) attributes {dimension_semantics = [#tpu.dimension_semantics<parallel>], iteration_bounds = array<i64: 1>, scalar_prefetch = 0 : i64, scratch_operands = 0 : i64, tpu.core_type = #tpu.core_type<tc>, window_params = [{transform_indices = @transform_0, window_bounds = array<i64: 8, 128>}, {pipeline_mode = #tpu.pipeline_mode<synchronous>, transform_indices = @transform_1, window_bounds = array<i64: 128, 128>}, {pipeline_mode = #tpu.pipeline_mode<synchronous>, transform_indices = @transform_2, window_bounds = array<i64: 1, 128>}, {pipeline_mode = #tpu.pipeline_mode<synchronous>, transform_indices = @transform_3, window_bounds = array<i64: 128, 128>}, {pipeline_mode = #tpu.pipeline_mode<synchronous>, transform_indices = @transform_4, window_bounds = array<i64: 1, 128>}, {transform_indices = @transform_5, window_bounds = array<i64: 8, 128>}, {transform_indices = @transform_6, window_bounds = array<i64: 8, 128>}]} {
    %c0 = arith.constant 0 : index
    %c0_0 = arith.constant 0 : index
    %0 = vector.load %arg1[%c0, %c0_0] : memref<8x128xf32, #tpu.memory_space<vmem>>, vector<8x128xf32>
    %c0_1 = arith.constant 0 : index
    %c0_2 = arith.constant 0 : index
    %1 = vector.load %arg2[%c0_1, %c0_2] : memref<128x128xf32, #tpu.memory_space<vmem>>, vector<128x128xf32>
    %cst = arith.constant dense<0.000000e+00> : vector<8x128xf32>
    %2 = tpu.matmul %0, %1, %cst {dimension_numbers = #tpu.dot_dimension_numbers<[1], [0], [0], [1], [0, 0, 1, 1], [], []>} : vector<8x128xf32>, vector<128x128xf32>, vector<8x128xf32> -> vector<8x128xf32>
    %c0_3 = arith.constant 0 : index
    %c0_4 = arith.constant 0 : index
    %3 = vector.load %arg3[%c0_3, %c0_4] : memref<1x128xf32, #tpu.memory_space<vmem>>, vector<1x128xf32>
    %4 = vector.broadcast %3 : vector<1x128xf32> to vector<8x128xf32>
    %5 = arith.addf %2, %4 : vector<8x128xf32>
    %cst_5 = arith.constant 0.000000e+00 : f32
    %6 = vector.broadcast %cst_5 : f32 to vector<8x128xf32>
    %7 = arith.maximumf %5, %6 : vector<8x128xf32>
    %c0_6 = arith.constant 0 : index
    %c0_7 = arith.constant 0 : index
    %8 = vector.load %arg4[%c0_6, %c0_7] : memref<128x128xf32, #tpu.memory_space<vmem>>, vector<128x128xf32>
    %cst_8 = arith.constant dense<0.000000e+00> : vector<8x128xf32>
    %9 = tpu.matmul %7, %8, %cst_8 {dimension_numbers = #tpu.dot_dimension_numbers<[1], [0], [0], [1], [0, 0, 1, 1], [], []>} : vector<8x128xf32>, vector<128x128xf32>, vector<8x128xf32> -> vector<8x128xf32>
    %c0_9 = arith.constant 0 : index
    %c0_10 = arith.constant 0 : index
    %10 = vector.load %arg5[%c0_9, %c0_10] : memref<1x128xf32, #tpu.memory_space<vmem>>, vector<1x128xf32>
    %11 = vector.broadcast %10 : vector<1x128xf32> to vector<8x128xf32>
    %12 = arith.addf %9, %11 : vector<8x128xf32>
    %13 = arith.negf %12 : vector<8x128xf32>
    %14 = math.exp %13 : vector<8x128xf32>
    %cst_11 = arith.constant 1.000000e+00 : f32
    %15 = vector.broadcast %cst_11 : f32 to vector<8x128xf32>
    %16 = arith.addf %15, %14 : vector<8x128xf32>
    %17 = arith.divf %15, %16 : vector<8x128xf32>
    %c0_12 = arith.constant 0 : index
    %c0_13 = arith.constant 0 : index
    %18 = vector.load %arg7[%c0_12, %c0_13] : memref<8x128xf32, #tpu.memory_space<vmem>>, vector<8x128xf32>
    tpu.vector_store %arg7[%c0_12, %c0_13], %17 {strides = array<i32>} : memref<8x128xf32, #tpu.memory_space<vmem>>, vector<8x128xf32>,
    %19 = arith.mulf %17, %0 : vector<8x128xf32>
    %c0_14 = arith.constant 0 : index
    %c0_15 = arith.constant 0 : index
    %20 = vector.load %arg6[%c0_14, %c0_15] : memref<8x128xf32, #tpu.memory_space<vmem>>, vector<8x128xf32>
    tpu.vector_store %arg6[%c0_14, %c0_15], %19 {strides = array<i32>} : memref<8x128xf32, #tpu.memory_space<vmem>>, vector<8x128xf32>,
    return
  }
  func.func @transform_0(%arg0: i32) -> (i32, i32) {
    %c0_i32 = arith.constant 0 : i32
    %c0_i32_0 = arith.constant 0 : i32
    return %arg0, %c0_i32 : i32, i32
  }
  func.func @transform_1(%arg0: i32) -> (i32, i32) {
    %c0_i32 = arith.constant 0 : i32
    %c0_i32_0 = arith.constant 0 : i32
    %c0_i32_1 = arith.constant 0 : i32
    return %c0_i32, %c0_i32_0 : i32, i32
  }
  func.func @transform_2(%arg0: i32) -> (i32, i32) {
    %c0_i32 = arith.constant 0 : i32
    %c0_i32_0 = arith.constant 0 : i32
    %c0_i32_1 = arith.constant 0 : i32
    return %c0_i32, %c0_i32_0 : i32, i32
  }
  func.func @transform_3(%arg0: i32) -> (i32, i32) {
    %c0_i32 = arith.constant 0 : i32
    %c0_i32_0 = arith.constant 0 : i32
    %c0_i32_1 = arith.constant 0 : i32
    return %c0_i32, %c0_i32_0 : i32, i32
  }
  func.func @transform_4(%arg0: i32) -> (i32, i32) {
    %c0_i32 = arith.constant 0 : i32
    %c0_i32_0 = arith.constant 0 : i32
    %c0_i32_1 = arith.constant 0 : i32
    return %c0_i32, %c0_i32_0 : i32, i32
  }
  func.func @transform_5(%arg0: i32) -> (i32, i32) {
    %c0_i32 = arith.constant 0 : i32
    %c0_i32_0 = arith.constant 0 : i32
    return %arg0, %c0_i32 : i32, i32
  }
  func.func @transform_6(%arg0: i32) -> (i32, i32) {
    %c0_i32 = arith.constant 0 : i32
    %c0_i32_0 = arith.constant 0 : i32
    return %arg0, %c0_i32 : i32, i32
  }
}

</mosaic_0001>

<llo_original>
// kernel: tpu_custom_call.1
$region0: #{tpu_custom_call.1}
  #allocation0 [shape = 'u32[]', space=smem, size = 0x4, offset = 0x4, fixed_abs, tag = 'smem constant byte address 0x4 - core index']
  #allocation1 [shape = 'u32[72,128]{1,0:T(1,128)}', space=vmem, size = 0x9000, scoped, tag = 'internal scratch']
  %s0 = inlined_call_operand.hbm [shape: f32[8,128], index: 0, kind: input, shape index: {}]
  %s1 = inlined_call_operand.hbm [shape: f32[128,128], index: 1, kind: input, shape index: {}]
  %s2 = inlined_call_operand.vmem [shape: f32[1,128], index: 2, kind: input, shape index: {}]
  %s3 = inlined_call_operand.hbm [shape: f32[128,128], index: 3, kind: input, shape index: {}]
  %s4 = inlined_call_operand.vmem [shape: f32[1,128], index: 4, kind: input, shape index: {}]
  %s5 = inlined_call_operand.hbm [shape: f32[8,128], index: 5, kind: output, shape index: {0}]
  %s6 = inlined_call_operand.hbm [shape: f32[8,128], index: 6, kind: output, shape index: {1}]
  %7 = xla_tuple %s5, %s6
  %s8 = sld [smem:[#allocation0]]
  $region50: #{tpu_custom_call.1} parent=0
    _
  %s10 = ssub.s32 1, %s8
  %s11 = scalar_select 0, %s10, %s8
  $region1: #{tpu_custom_call.1} parent=0
    #allocation2 [shape = 'u8[4096]{0}', space=vmem, size = 0x1000, scoped, tag = 'input window, operand 0, single buffered']
    #allocation3 [shape = 's32[1]{0}', space=sflag, size = 0x4, scoped, tag = 'scoped memory for tpu_custom_call.1']
    #allocation4 [shape = 's32[1]{0}', space=sflag, size = 0x4, scoped, tag = 'scoped memory for tpu_custom_call.1']
    #allocation5 [shape = 'u8[65536]{0}', space=vmem, size = 0x10000, scoped, tag = 'input window, operand 1, single buffered']
    #allocation6 [shape = 's32[1]{0}', space=sflag, size = 0x4, scoped, tag = 'scoped memory for tpu_custom_call.1']
    #allocation7 [shape = 'u8[65536]{0}', space=vmem, size = 0x10000, scoped, tag = 'input window, operand 3, single buffered']
    #allocation8 [shape = 'u8[4096]{0}', space=vmem, size = 0x1000, scoped, tag = 'output window, operand 0, single buffered']
    #allocation9 [shape = 'u8[4096]{0}', space=vmem, size = 0x1000, scoped, tag = 'output window, operand 1, single buffered']
    #allocation10 [shape = 's32[1]{0}', space=sflag, size = 0x4, scoped, tag = 'scoped memory for tpu_custom_call.1']
    %12 = vsyncpa [#allocation3], 0
    %13 = vsyncpa [#allocation6], 0
    %14 = vsyncpa [#allocation4], 0
    %15 = vsyncpa [#allocation10], 0
    // Predicated region
    $region2: #{tpu_custom_call.1} parent=1 // pred_check
      _
    $region3: #{tpu_custom_call.1} parent=1 // pred_check_branch
      %17 = sbr.rel (0) target = $region5
    $region4: #{tpu_custom_call.1} parent=1 // pred_region
      %19 = vsyncadd [#allocation3], 0
      %s21 = sshll.u32 %s0, 4
      %s22 = int_to_ptr.hbm [resolvable:$true] %s21
      %s23 = sshll.u32 [#allocation2], 4
      %s24 = int_to_ptr.vmem [resolvable:$true] %s23
      %26 = dma.hbm_to_vmem [thread:$0]  %s22, 128, %s24, [#allocation3]
    $region5: #{tpu_custom_call.1} parent=1 // pred_fallthru
      _
    // Predicated region
    $region6: #{tpu_custom_call.1} parent=1 // pred_check
      _
    $region7: #{tpu_custom_call.1} parent=1 // pred_check_branch
      %28 = sbr.rel (0) target = $region9
    $region8: #{tpu_custom_call.1} parent=1 // pred_region
      %30 = vsyncadd [#allocation6], 0
      %s31 = sshll.u32 %s1, 4
      %s32 = int_to_ptr.hbm [resolvable:$true] %s31
      %s33 = sshll.u32 [#allocation5], 4
      %s34 = int_to_ptr.vmem [resolvable:$true] %s33
      %39 = dma.hbm_to_vmem [thread:$0]  %s32, 2048, %s34, [#allocation6], 128, 128, 8
    $region9: #{tpu_custom_call.1} parent=1 // pred_fallthru
      _
    // Predicated region
    $region10: #{tpu_custom_call.1} parent=1 // pred_check
      _
    $region11: #{tpu_custom_call.1} parent=1 // pred_check_branch
      %41 = sbr.rel (0) target = $region13
    $region12: #{tpu_custom_call.1} parent=1 // pred_region
      _
    $region13: #{tpu_custom_call.1} parent=1 // pred_fallthru
      _
    // Predicated region
    $region14: #{tpu_custom_call.1} parent=1 // pred_check
      _
    $region15: #{tpu_custom_call.1} parent=1 // pred_check_branch
      %43 = sbr.rel (0) target = $region17
    $region16: #{tpu_custom_call.1} parent=1 // pred_region
      %45 = vsyncadd [#allocation6], 0
      %s46 = sshll.u32 %s3, 4
      %s47 = int_to_ptr.hbm [resolvable:$true] %s46
      %s48 = sshll.u32 [#allocation7], 4
      %s49 = int_to_ptr.vmem [resolvable:$true] %s48
      %54 = dma.hbm_to_vmem [thread:$0]  %s47, 2048, %s49, [#allocation6], 128, 128, 8
    $region17: #{tpu_custom_call.1} parent=1 // pred_fallthru
      _
    // Predicated region
    $region18: #{tpu_custom_call.1} parent=1 // pred_check
      _
    $region19: #{tpu_custom_call.1} parent=1 // pred_check_branch
      %56 = sbr.rel (0) target = $region21
    $region20: #{tpu_custom_call.1} parent=1 // pred_region
      _
    $region21: #{tpu_custom_call.1} parent=1 // pred_fallthru
      _
    // Predicated region
    $region22: #{tpu_custom_call.1} parent=1 // pred_check
      _
    $region23: #{tpu_custom_call.1} parent=1 // pred_check_branch
      %58 = sbr.rel (0) target = $region25
    $region24: #{tpu_custom_call.1} parent=1 // pred_region
      %60 = dma.done [#allocation3], 128
    $region25: #{tpu_custom_call.1} parent=1 // pred_fallthru
      _
    // Predicated region
    $region26: #{tpu_custom_call.1} parent=1 // pred_check
      _
    $region27: #{tpu_custom_call.1} parent=1 // pred_check_branch
      %62 = sbr.rel (0) target = $region29
    $region28: #{tpu_custom_call.1} parent=1 // pred_region
      %64 = dma.done [#allocation6], 2048
    $region29: #{tpu_custom_call.1} parent=1 // pred_fallthru
      _
    // Predicated region
    $region30: #{tpu_custom_call.1} parent=1 // pred_check
      _
    $region31: #{tpu_custom_call.1} parent=1 // pred_check_branch
      %66 = sbr.rel (0) target = $region33
    $region32: #{tpu_custom_call.1} parent=1 // pred_region
      %68 = dma.done [#allocation6], 2048
    $region33: #{tpu_custom_call.1} parent=1 // pred_fallthru
      _
    %v69 = vld [vmem:[#allocation2] sm:$0xff]
    %v70 = vld [vmem:[#allocation5] sm:$0xff]
    %v71 = vld [vmem:[#allocation5 + $0x8] sm:$0xff]
    %v72 = vld [vmem:[#allocation5 + $0x10] sm:$0xff]
    %v73 = vld [vmem:[#allocation5 + $0x18] sm:$0xff]
    %v74 = vld [vmem:[#allocation5 + $0x20] sm:$0xff]
    %v75 = vld [vmem:[#allocation5 + $0x28] sm:$0xff]
    %v76 = vld [vmem:[#allocation5 + $0x30] sm:$0xff]
    %v77 = vld [vmem:[#allocation5 + $0x38] sm:$0xff]
    %v78 = vld [vmem:[#allocation5 + $0x40] sm:$0xff]
    %v79 = vld [vmem:[#allocation5 + $0x48] sm:$0xff]
    %v80 = vld [vmem:[#allocation5 + $0x50] sm:$0xff]
    %v81 = vld [vmem:[#allocation5 + $0x58] sm:$0xff]
    %v82 = vld [vmem:[#allocation5 + $0x60] sm:$0xff]
    %v83 = vld [vmem:[#allocation5 + $0x68] sm:$0xff]
    %v84 = vld [vmem:[#allocation5 + $0x70] sm:$0xff]
    %v85 = vld [vmem:[#allocation5 + $0x78] sm:$0xff]
    %v86 = vld [vmem:[%s2] sm:$0x1]
    %v88 = vperm.slane %v86, 0
    %90 = vmatpush.msra.mxu0 %v85
    %91 = vmatpush.msra.mxu0 %v84
    %92 = vmatpush.msra.mxu0 %v83
    %93 = vmatpush.msra.mxu0 %v82
    %94 = vmatpush.msra.mxu0 %v81
    %95 = vmatpush.msra.mxu0 %v80
    %96 = vmatpush.msra.mxu0 %v79
    %97 = vmatpush.msra.mxu0 %v78
    %98 = vmatpush.msra.mxu0 %v77
    %99 = vmatpush.msra.mxu0 %v76
    %100 = vmatpush.msra.mxu0 %v75
    %101 = vmatpush.msra.mxu0 %v74
    %102 = vmatpush.msra.mxu0 %v73
    %103 = vmatpush.msra.mxu0 %v72
    %104 = vmatpush.msra.mxu0 %v71
    %105 = vmatpush.msra.mxu0 %v70
    %106 = vmatmul.f32.gmra.mxu0 %v69
    %v107 = vpop.f32.mrf.mxu0
    %v108 = vadd.f32 %v88, %v107
    %109 = vdwg.mxu0
    %v110 = vmax.f32 %v108, 0.0
    %v111 = vld [vmem:[#allocation7] sm:$0xff]
    %v112 = vld [vmem:[#allocation7 + $0x8] sm:$0xff]
    %v113 = vld [vmem:[#allocation7 + $0x10] sm:$0xff]
    %v114 = vld [vmem:[#allocation7 + $0x18] sm:$0xff]
    %v115 = vld [vmem:[#allocation7 + $0x20] sm:$0xff]
    %v116 = vld [vmem:[#allocation7 + $0x28] sm:$0xff]
    %v117 = vld [vmem:[#allocation7 + $0x30] sm:$0xff]
    %v118 = vld [vmem:[#allocation7 + $0x38] sm:$0xff]
    %v119 = vld [vmem:[#allocation7 + $0x40] sm:$0xff]
    %v120 = vld [vmem:[#allocation7 + $0x48] sm:$0xff]
    %v121 = vld [vmem:[#allocation7 + $0x50] sm:$0xff]
    %v122 = vld [vmem:[#allocation7 + $0x58] sm:$0xff]
    %v123 = vld [vmem:[#allocation7 + $0x60] sm:$0xff]
    %v124 = vld [vmem:[#allocation7 + $0x68] sm:$0xff]
    %v125 = vld [vmem:[#allocation7 + $0x70] sm:$0xff]
    %v126 = vld [vmem:[#allocation7 + $0x78] sm:$0xff]
    %v127 = vld [vmem:[%s4] sm:$0x1]
    %v129 = vperm.slane %v127, 0
    %131 = vmatpush.msra.mxu0 %v126
    %132 = vmatpush.msra.mxu0 %v125
    %133 = vmatpush.msra.mxu0 %v124
    %134 = vmatpush.msra.mxu0 %v123
    %135 = vmatpush.msra.mxu0 %v122
    %136 = vmatpush.msra.mxu0 %v121
    %137 = vmatpush.msra.mxu0 %v120
    %138 = vmatpush.msra.mxu0 %v119
    %139 = vmatpush.msra.mxu0 %v118
    %140 = vmatpush.msra.mxu0 %v117
    %141 = vmatpush.msra.mxu0 %v116
    %142 = vmatpush.msra.mxu0 %v115
    %143 = vmatpush.msra.mxu0 %v114
    %144 = vmatpush.msra.mxu0 %v113
    %145 = vmatpush.msra.mxu0 %v112
    %146 = vmatpush.msra.mxu0 %v111
    %147 = vmatmul.f32.gmra.mxu0 %v110
    %v148 = vpop.f32.mrf.mxu0
    %v149 = vadd.f32 %v129, %v148
    %150 = vdwg.mxu0
    %v151 = vxor.u32 %v149, 2147483648
    %v152 = vmul.f32 %v151, 1.442695
    %v153 = vpow.pop %v152
    %v154 = vadd.f32 %v153, 1.0
    %v155 = vrcp.pop %v154
    %v156 = vmul.f32 %v154, %v155
    %v157 = vsub.f32 1.0, %v156
    %v158 = vmul.f32 %v155, %v157
    %v159 = vadd.f32 %v155, %v158
    %vm160 = vweird.f32 %v154
    %vm161 = vweird.f32 %v155
    %vm162 = vmor %vm160, %vm161
    %v163 = vsel %vm162, %v155, %v159
    %v164 = vand.u32 2147483647, %v154
    %vm165 = vcmp.eq.f32.partialorder %v164, 8.507059e+37
    %v166 = vand.u32 %v154, 2147483648
    %v167 = vor.u32 1.1754944e-38, %v166
    %v168 = vsel %vm165, %v167, %v163
    %v169 = vmul.f32 1.0, %v168
    %170 = vst [vmem:[#allocation9] sm:$0xff] %v169
    %v171 = vmul.f32 %v169, %v69
    %172 = vst [vmem:[#allocation8] sm:$0xff] %v171
    // Predicated region
    $region34: #{tpu_custom_call.1} parent=1 // pred_check
      _
    $region35: #{tpu_custom_call.1} parent=1 // pred_check_branch
      %174 = sbr.rel (0) target = $region37
    $region36: #{tpu_custom_call.1} parent=1 // pred_region
      %176 = vsyncadd [#allocation4], 0
      %s178 = sshll.u32 [#allocation8], 4
      %s179 = int_to_ptr.vmem [resolvable:$true] %s178
      %s180 = sshll.u32 %s5, 4
      %s181 = int_to_ptr.hbm [resolvable:$true] %s180
      %183 = dma.vmem_to_hbm [thread:$0]  %s179, 128, %s181, [#allocation4]
    $region37: #{tpu_custom_call.1} parent=1 // pred_fallthru
      _
    // Predicated region
    $region38: #{tpu_custom_call.1} parent=1 // pred_check
      _
    $region39: #{tpu_custom_call.1} parent=1 // pred_check_branch
      %185 = sbr.rel (0) target = $region41
    $region40: #{tpu_custom_call.1} parent=1 // pred_region
      %187 = vsyncadd [#allocation10], 0
      %s189 = sshll.u32 [#allocation9], 4
      %s190 = int_to_ptr.vmem [resolvable:$true] %s189
      %s191 = sshll.u32 %s6, 4
      %s192 = int_to_ptr.hbm [resolvable:$true] %s191
      %194 = dma.vmem_to_hbm [thread:$0]  %s190, 128, %s192, [#allocation10]
    $region41: #{tpu_custom_call.1} parent=1 // pred_fallthru
      _
    // Predicated region
    $region42: #{tpu_custom_call.1} parent=1 // pred_check
      _
    $region43: #{tpu_custom_call.1} parent=1 // pred_check_branch
      %196 = sbr.rel (0) target = $region45
    $region44: #{tpu_custom_call.1} parent=1 // pred_region
      %198 = dma.done [#allocation4], 128
    $region45: #{tpu_custom_call.1} parent=1 // pred_fallthru
      _
    // Predicated region
    $region46: #{tpu_custom_call.1} parent=1 // pred_check
      _
    $region47: #{tpu_custom_call.1} parent=1 // pred_check_branch
      %200 = sbr.rel (0) target = $region49
    $region48: #{tpu_custom_call.1} parent=1 // pred_region
      %202 = dma.done [#allocation10], 128
    $region49: #{tpu_custom_call.1} parent=1 // pred_fallthru
      _
    %203 = vsyncpa [#allocation3], 1
    %204 = vsyncpa [#allocation6], 1
    %205 = vsyncpa [#allocation4], 1
    %206 = vsyncpa [#allocation10], 1

</llo_original>
